<compile_context>
chip_gen: v5e
topology: v5e:2x2
jax: 0.10.0
libtpu: 0.0.40
codegen_flags: <defaults>
</compile_context>

<pallas_src>
import functools
import math

import jax
import jax.numpy as jnp
from jax import lax
from jax.experimental import pallas as pl
from jax.experimental.pallas import tpu as pltpu


# ----------------------------------------------------------------------------
# Kernel helpers
# ----------------------------------------------------------------------------
def _fast_recip(x):
    """EUP approximate reciprocal + one Newton step (~f32-exact, no VALU div)."""
    r = pl.reciprocal(x, approx=True)
    return r * (2.0 - x * r)


def _head_softmax(q_ref, k_ref, h, *, qk_features, scale, inverted_attn):
    """Softmax probabilities for head `h`.

    q_ref: (tq, H*F)   k_ref: (K, H*F)   ->   probs (tq, K) in f32.
    The 1/sqrt(F) scale is folded into the small (tq, F) q tile (matches the
    torch module, which divides `query` before the matmul).
    """
    F = qk_features
    q_h = q_ref[:, h * F:(h + 1) * F] * scale          # native dtype, (tq, F)
    k_h = k_ref[:, h * F:(h + 1) * F]                  # native dtype, (K, F)
    scores = lax.dot_general(                          # contract F directly,
        q_h, k_h,                                      # no k.T materialization
        dimension_numbers=(((1,), (1,)), ((), ())),
        preferred_element_type=jnp.float32)            # (tq, K) f32 on the MXU
    axis = -2 if inverted_attn else -1
    m = jnp.max(scores, axis=axis, keepdims=True)
    e = jnp.exp(scores - m)                            # EUP
    s = jnp.sum(e, axis=axis, keepdims=True)
    return e * _fast_recip(s)


def _attn_update_kernel(q_ref, k_ref, v_ref, upd_ref, attn_ref, *,
                        num_heads, qk_features, v_features, scale,
                        inverted_attn, renormalize_keys, epsilon):
    """Default path: writes attention weights and the value-weighted updates.

    q_ref: (tq, H*F)  k_ref: (K, H*F)  v_ref: (K, H*D)
    upd_ref: (tq, H*D)  attn_ref: (H, tq, K)
    """
    D = v_features
    for h in range(num_heads):
        probs = _head_softmax(q_ref, k_ref, h, qk_features=qk_features,
                              scale=scale, inverted_attn=inverted_attn)
        # The module returns the *pre-renormalization* weights in the tuple.
        probs_out = probs.astype(attn_ref.dtype)
        attn_ref[h] = probs_out
        # Feed the MXU in the value dtype; reuse the cast when dtypes match.
        pv = probs_out if attn_ref.dtype == v_ref.dtype else probs.astype(v_ref.dtype)
        upd = jnp.dot(pv, v_ref[:, h * D:(h + 1) * D],
                      preferred_element_type=jnp.float32)       # (tq, D) f32
        if renormalize_keys:
            # Row scaling commutes with the PV matmul -> apply it to the small
            # (tq, D) result instead of the (tq, K) probability tile.
            norm = jnp.sum(probs, axis=-1, keepdims=True) + epsilon
            upd = upd * _fast_recip(norm)
        upd_ref[:, h * D:(h + 1) * D] = upd.astype(upd_ref.dtype)


def _attn_weights_kernel(q_ref, k_ref, attn_ref, *,
                         num_heads, qk_features, scale,
                         inverted_attn, renormalize_keys, epsilon):
    """attn_weights_only path: no PV matmul, no updates output, no value read."""
    for h in range(num_heads):
        probs = _head_softmax(q_ref, k_ref, h, qk_features=qk_features,
                              scale=scale, inverted_attn=inverted_attn)
        if renormalize_keys:
            norm = jnp.sum(probs, axis=-1, keepdims=True) + epsilon
            probs = probs * _fast_recip(norm)
        attn_ref[h] = probs.astype(attn_ref.dtype)


# ----------------------------------------------------------------------------
# Generation-aware tiling heuristics
# ----------------------------------------------------------------------------
def _vmem_capacity_bytes():
    try:
        return int(pltpu.get_tpu_info().vmem_capacity_bytes)
    except Exception:
        pass
    try:
        kind = jax.devices()[0].device_kind.lower()
        if "v7" in kind or "7x" in kind:
            return 64 * 1024 * 1024
        return 128 * 1024 * 1024
    except Exception:
        return 64 * 1024 * 1024            # conservative (v7x-like)


def _vmem_budget():
    cap = _vmem_capacity_bytes()
    limit = min((cap * 3) // 4, 100 * 1024 * 1024)   # 48 MiB v7x / ~96 MiB v5e-v6e
    budget = max(limit - 6 * 1024 * 1024, 8 * 1024 * 1024)  # Mosaic scratch headroom
    return limit, budget


def _tile_granularity():
    """Preferred q-tile multiple: 128 on 128x128-MXU chips, 256 on v6e/v7x."""
    try:
        kind = jax.devices()[0].device_kind.lower()
        if "v6" in kind or "v7" in kind or "7x" in kind:
            return 256
    except Exception:
        pass
    return 128


def _pick_q_tile(Q, K, H, F, D, q_it, k_it, v_it, attn_it, upd_it,
                 budget_bytes, weights_only, inverted_attn, granularity):
    """Largest q tile whose double-buffered block working set fits the budget."""
    # Resident K/V blocks (double-buffered across the batch axis by the pipeline).
    fixed = 2 * K * H * F * k_it
    if not weights_only:
        fixed += 2 * K * H * D * v_it
    # Per-q-row: q / attn (/ upd) blocks (double-buffered) plus single-buffered
    # in-kernel f32 intermediates (scores, exp, cast copy) for one live head.
    per_row = 2 * (H * F * q_it + H * K * attn_it)
    if not weights_only:
        per_row += 2 * H * D * upd_it
    per_row += 3 * K * 4
    avail = budget_bytes - fixed
    tq_max = avail // per_row if avail > 0 else 0

    if inverted_attn:
        # Softmax runs along Q -> the whole Q extent must be resident.
        if tq_max < Q:
            raise ValueError(
                f"inverted_attn working set (Q={Q}, K={K}, H={H}) exceeds the "
                f"VMEM budget ({budget_bytes} bytes); K-tiling with an "
                f"accumulating finalize pass is not implemented yet.")
        return Q
    if Q <= tq_max:
        return Q
    min_tile = 128
    if tq_max < min_tile:
        raise ValueError(
            f"attention working set (K={K}, H={H}, F={F}, D={D}) leaves room "
            f"for a q tile of only {tq_max} rows (< {min_tile}); refusing to "
            f"degrade silently. Reduce K/H or use a K-tiled variant.")
    gran = granularity if tq_max >= granularity else min_tile
    base = (tq_max // gran) * gran
    for cand in range(base, gran - 1, -gran):       # prefer a tile dividing Q
        if Q % cand == 0:
            return cand
    return base      # ragged last tile: cdiv grid + masked boundary stores


# ----------------------------------------------------------------------------
# Public wrapper (mirrors GeneralizedDotProductAttention.forward)
# ----------------------------------------------------------------------------
def generalized_dot_product_attention(query, key, value, *,
                                      epsilon=1e-8,
                                      inverted_attn=False,
                                      renormalize_keys=False,
                                      attn_weights_only=False,
                                      dtype=jnp.float32):
    """query: [B, Q, H, F], key: [B, K, H, F], value: [B, K, H, D].

    Returns (updates [B, Q, H, D], attn [B, H, Q, K]) by default, or the
    (renormalized) attention weights [B, H, Q, K] if attn_weights_only=True.
    """
    assert query.ndim == key.ndim == value.ndim == 4
    assert query.shape[0] == key.shape[0] == value.shape[0]
    assert query.shape[2] == key.shape[2] == value.shape[2]
    assert key.shape[1] == value.shape[1]
    assert query.shape[-1] == key.shape[-1]

    B, Q, H, F = query.shape
    K = key.shape[1]
    D = value.shape[-1]
    scale = 1.0 / math.sqrt(F)

    # Free (contiguous) reshapes: fold heads into the lane dimension. No HBM
    # transposes are needed for any H.
    q2 = query.reshape(B, Q, H * F)
    k2 = key.reshape(B, K, H * F)
    v2 = value.reshape(B, K, H * D)

    attn_dtype = jnp.dtype(dtype)
    upd_dtype = jnp.promote_types(attn_dtype, value.dtype)

    vmem_limit, budget = _vmem_budget()
    gran = _tile_granularity()
    tq = _pick_q_tile(Q, K, H, F, D,
                      jnp.dtype(query.dtype).itemsize,
                      jnp.dtype(key.dtype).itemsize,
                      jnp.dtype(value.dtype).itemsize,
                      attn_dtype.itemsize,
                      jnp.dtype(upd_dtype).itemsize,
                      budget, attn_weights_only, inverted_attn, gran)
    nq = pl.cdiv(Q, tq)

    q_spec = pl.BlockSpec((None, tq, H * F), lambda b, qi: (b, qi, 0))
    k_spec = pl.BlockSpec((None, K, H * F), lambda b, qi: (b, 0, 0))
    v_spec = pl.BlockSpec((None, K, H * D), lambda b, qi: (b, 0, 0))
    attn_spec = pl.BlockSpec((None, H, tq, K), lambda b, qi: (b, 0, qi, 0))
    upd_spec = pl.BlockSpec((None, tq, H * D), lambda b, qi: (b, qi, 0))

    compiler_params = pltpu.CompilerParams(
        dimension_semantics=("parallel", "parallel"),
        vmem_limit_bytes=vmem_limit)

    if attn_weights_only:
        kernel = functools.partial(
            _attn_weights_kernel, num_heads=H, qk_features=F, scale=scale,
            inverted_attn=inverted_attn, renormalize_keys=renormalize_keys,
            epsilon=epsilon)
        return pl.pallas_call(
            kernel,
            out_shape=jax.ShapeDtypeStruct((B, H, Q, K), attn_dtype),
            grid_spec=pltpu.PrefetchScalarGridSpec(
                num_scalar_prefetch=0,
                grid=(B, nq),
                in_specs=[q_spec, k_spec],
                out_specs=attn_spec),
            compiler_params=compiler_params,
        )(q2, k2)

    kernel = functools.partial(
        _attn_update_kernel, num_heads=H, qk_features=F, v_features=D,
        scale=scale, inverted_attn=inverted_attn,
        renormalize_keys=renormalize_keys, epsilon=epsilon)
    upd2, attn = pl.pallas_call(
        kernel,
        out_shape=(
            jax.ShapeDtypeStruct((B, Q, H * D), upd_dtype),   # updates (packed heads)
            jax.ShapeDtypeStruct((B, H, Q, K), attn_dtype),   # attention weights
        ),
        grid_spec=pltpu.PrefetchScalarGridSpec(
            num_scalar_prefetch=0,
            grid=(B, nq),
            in_specs=[q_spec, k_spec, v_spec],
            out_specs=[upd_spec, attn_spec]),
        compiler_params=compiler_params,
    )(q2, k2, v2)

    updates = upd2.reshape(B, Q, H, D)                # free reshape
    return updates, attn


# ----------------------------------------------------------------------------
# Pure-JAX reference (mirrors the PyTorch forward for all flag combinations)
# ----------------------------------------------------------------------------
def _reference(query, key, value, *, epsilon=1e-8, inverted_attn=False,
               renormalize_keys=False, attn_weights_only=False):
    F = query.shape[-1]
    q = query / math.sqrt(F)
    attn = jnp.einsum('bqhf,bkhf->bhqk', q, key)
    axis = -2 if inverted_attn else -1
    attn = jax.nn.softmax(attn, axis=axis)
    if renormalize_keys:
        normalizer = jnp.sum(attn, axis=-1, keepdims=True) + epsilon
        attn_n = attn / normalizer
    else:
        attn_n = attn
    if attn_weights_only:
        return attn_n
    updates = jnp.einsum('bhqk,bkhd->bqhd', attn_n, value)
    return updates, attn


if __name__ == "__main__":
    # Small shapes consistent with the module: [batch, seq, num_heads, feat].
    B, Q, KV, H, F, D = 2, 8, 8, 4, 32, 32

    k0, k1, k2 = jax.random.split(jax.random.PRNGKey(0), 3)
    query = jax.random.normal(k0, (B, Q, H, F), dtype=jnp.float32)
    key = jax.random.normal(k1, (B, KV, H, F), dtype=jnp.float32)
    value = jax.random.normal(k2, (B, KV, H, D), dtype=jnp.float32)

    # 1) Default flags: returns (updates, attn).
    updates, attn = generalized_dot_product_attention(query, key, value)
    jax.block_until_ready((updates, attn))
    upd_ref, attn_ref = _reference(query, key, value)
    assert updates.shape == (B, Q, H, D)
    assert attn.shape == (B, H, Q, KV)
    assert jnp.allclose(updates, upd_ref, atol=1e-3, rtol=1e-3)
    assert jnp.allclose(attn, attn_ref, atol=1e-3, rtol=1e-3)

    # 2) Slot-attention style flags: inverted softmax + key renormalization.
    upd_i, attn_i = generalized_dot_product_attention(
        query, key, value, inverted_attn=True, renormalize_keys=True)
    jax.block_until_ready((upd_i, attn_i))
    upd_i_ref, attn_i_ref = _reference(
        query, key, value, inverted_attn=True, renormalize_keys=True)
    assert jnp.allclose(upd_i, upd_i_ref, atol=1e-3, rtol=1e-3)
    assert jnp.allclose(attn_i, attn_i_ref, atol=1e-3, rtol=1e-3)

    # 3) attn_weights_only path (skips the PV matmul / updates output).
    w = generalized_dot_product_attention(
        query, key, value, inverted_attn=True, renormalize_keys=True,
        attn_weights_only=True)
    jax.block_until_ready(w)
    w_ref = _reference(query, key, value, inverted_attn=True,
                       renormalize_keys=True, attn_weights_only=True)
    assert w.shape == (B, H, Q, KV)
    assert jnp.allclose(w, w_ref, atol=1e-3, rtol=1e-3)

    print("KERNEL_OK")
</pallas_src>

<mosaic_0001>
module attributes {stable_mosaic.version = 11 : i64} {
  func.func @_attn_update_kernel(%arg0: i32, %arg1: i32, %arg2: memref<1x8x128xf32, #tpu.memory_space<vmem>>, %arg3: memref<1x8x128xf32, #tpu.memory_space<vmem>>, %arg4: memref<1x8x128xf32, #tpu.memory_space<vmem>>, %arg5: memref<1x8x128xf32, #tpu.memory_space<vmem>>, %arg6: memref<1x4x8x8xf32, #tpu.memory_space<vmem>>) attributes {dimension_semantics = [#tpu.dimension_semantics<parallel>, #tpu.dimension_semantics<parallel>], iteration_bounds = array<i64: 2, 1>, scalar_prefetch = 0 : i64, scratch_operands = 0 : i64, tpu.core_type = #tpu.core_type<tc>, window_params = [{transform_indices = @transform_0, window_bounds = array<i64: 1, 8, 128>}, {transform_indices = @transform_1, window_bounds = array<i64: 1, 8, 128>}, {transform_indices = @transform_2, window_bounds = array<i64: 1, 8, 128>}, {transform_indices = @transform_3, window_bounds = array<i64: 1, 8, 128>}, {transform_indices = @transform_4, window_bounds = array<i64: 1, 4, 8, 8>}]} {
    %c0 = arith.constant 0 : index
    %c0_0 = arith.constant 0 : index
    %c0_1 = arith.constant 0 : index
    %0 = vector.load %arg2[%c0, %c0_0, %c0_1] : memref<1x8x128xf32, #tpu.memory_space<vmem>>, vector<1x8x32xf32>
    %1 = vector.shape_cast %0 : vector<1x8x32xf32> to vector<8x32xf32>
    %cst = arith.constant 0.176776692 : f32
    %2 = vector.broadcast %cst : f32 to vector<8x32xf32>
    %3 = arith.mulf %1, %2 : vector<8x32xf32>
    %c0_2 = arith.constant 0 : index
    %c0_3 = arith.constant 0 : index
    %c0_4 = arith.constant 0 : index
    %4 = vector.load %arg3[%c0_2, %c0_3, %c0_4] : memref<1x8x128xf32, #tpu.memory_space<vmem>>, vector<1x8x32xf32>
    %5 = vector.shape_cast %4 : vector<1x8x32xf32> to vector<8x32xf32>
    %cst_5 = arith.constant dense<0.000000e+00> : vector<8x8xf32>
    %6 = tpu.matmul %3, %5, %cst_5 {dimension_numbers = #tpu.dot_dimension_numbers<[1], [1], [0], [0], [0, 0, 1, 0], [], []>} : vector<8x32xf32>, vector<8x32xf32>, vector<8x8xf32> -> vector<8x8xf32>
    %cst_6 = arith.constant dense<0xFF800000> : vector<8xf32>
    %7 = vector.multi_reduction <maximumf>, %6, %cst_6 [1] : vector<8x8xf32> to vector<8xf32>
    %8 = vector.shape_cast %7 : vector<8xf32> to vector<8x1xf32>
    %9 = vector.broadcast %8 : vector<8x1xf32> to vector<8x8xf32>
    %10 = arith.subf %6, %9 : vector<8x8xf32>
    %11 = math.exp %10 : vector<8x8xf32>
    %cst_7 = arith.constant dense<0.000000e+00> : vector<8xf32>
    %12 = vector.multi_reduction <add>, %11, %cst_7 [1] : vector<8x8xf32> to vector<8xf32>
    %13 = vector.shape_cast %12 : vector<8xf32> to vector<8x1xf32>
    %14 = tpu.reciprocal %13 {approx = true} : vector<8x1xf32> -> vector<8x1xf32>
    %15 = arith.mulf %13, %14 : vector<8x1xf32>
    %cst_8 = arith.constant 2.000000e+00 : f32
    %16 = vector.broadcast %cst_8 : f32 to vector<8x1xf32>
    %17 = arith.subf %16, %15 : vector<8x1xf32>
    %18 = arith.mulf %14, %17 : vector<8x1xf32>
    %19 = vector.broadcast %18 : vector<8x1xf32> to vector<8x8xf32>
    %20 = arith.mulf %11, %19 : vector<8x8xf32>
    %c0_9 = arith.constant 0 : index
    %c0_10 = arith.constant 0 : index
    %c0_11 = arith.constant 0 : index
    %c0_12 = arith.constant 0 : index
    %21 = vector.load %arg6[%c0_9, %c0_10, %c0_11, %c0_12] : memref<1x4x8x8xf32, #tpu.memory_space<vmem>>, vector<1x1x8x8xf32>
    %22 = vector.shape_cast %21 : vector<1x1x8x8xf32> to vector<8x8xf32>
    %23 = vector.shape_cast %20 : vector<8x8xf32> to vector<1x1x8x8xf32>
    tpu.vector_store %arg6[%c0_9, %c0_10, %c0_11, %c0_12], %23 {strides = array<i32>} : memref<1x4x8x8xf32, #tpu.memory_space<vmem>>, vector<1x1x8x8xf32>,
    %c0_13 = arith.constant 0 : index
    %c0_14 = arith.constant 0 : index
    %c0_15 = arith.constant 0 : index
    %24 = vector.load %arg4[%c0_13, %c0_14, %c0_15] : memref<1x8x128xf32, #tpu.memory_space<vmem>>, vector<1x8x32xf32>
    %25 = vector.shape_cast %24 : vector<1x8x32xf32> to vector<8x32xf32>
    %cst_16 = arith.constant dense<0.000000e+00> : vector<8x32xf32>
    %26 = tpu.matmul %20, %25, %cst_16 {dimension_numbers = #tpu.dot_dimension_numbers<[1], [0], [0], [1], [0, 0, 1, 1], [], []>} : vector<8x8xf32>, vector<8x32xf32>, vector<8x32xf32> -> vector<8x32xf32>
    %c0_17 = arith.constant 0 : index
    %c0_18 = arith.constant 0 : index
    %c0_19 = arith.constant 0 : index
    %27 = vector.load %arg5[%c0_17, %c0_18, %c0_19] : memref<1x8x128xf32, #tpu.memory_space<vmem>>, vector<1x8x32xf32>
    %28 = vector.shape_cast %27 : vector<1x8x32xf32> to vector<8x32xf32>
    %29 = vector.shape_cast %26 : vector<8x32xf32> to vector<1x8x32xf32>
    tpu.vector_store %arg5[%c0_17, %c0_18, %c0_19], %29 {strides = array<i32>} : memref<1x8x128xf32, #tpu.memory_space<vmem>>, vector<1x8x32xf32>,
    %c0_20 = arith.constant 0 : index
    %c0_21 = arith.constant 0 : index
    %c32 = arith.constant 32 : index
    %30 = vector.load %arg2[%c0_20, %c0_21, %c32] : memref<1x8x128xf32, #tpu.memory_space<vmem>>, vector<1x8x32xf32>
    %31 = vector.shape_cast %30 : vector<1x8x32xf32> to vector<8x32xf32>
    %cst_22 = arith.constant 0.176776692 : f32
    %32 = vector.broadcast %cst_22 : f32 to vector<8x32xf32>
    %33 = arith.mulf %31, %32 : vector<8x32xf32>
    %c0_23 = arith.constant 0 : index
    %c0_24 = arith.constant 0 : index
    %c32_25 = arith.constant 32 : index
    %34 = vector.load %arg3[%c0_23, %c0_24, %c32_25] : memref<1x8x128xf32, #tpu.memory_space<vmem>>, vector<1x8x32xf32>
    %35 = vector.shape_cast %34 : vector<1x8x32xf32> to vector<8x32xf32>
    %cst_26 = arith.constant dense<0.000000e+00> : vector<8x8xf32>
    %36 = tpu.matmul %33, %35, %cst_26 {dimension_numbers = #tpu.dot_dimension_numbers<[1], [1], [0], [0], [0, 0, 1, 0], [], []>} : vector<8x32xf32>, vector<8x32xf32>, vector<8x8xf32> -> vector<8x8xf32>
    %cst_27 = arith.constant dense<0xFF800000> : vector<8xf32>
    %37 = vector.multi_reduction <maximumf>, %36, %cst_27 [1] : vector<8x8xf32> to vector<8xf32>
    %38 = vector.shape_cast %37 : vector<8xf32> to vector<8x1xf32>
    %39 = vector.broadcast %38 : vector<8x1xf32> to vector<8x8xf32>
    %40 = arith.subf %36, %39 : vector<8x8xf32>
    %41 = math.exp %40 : vector<8x8xf32>
    %cst_28 = arith.constant dense<0.000000e+00> : vector<8xf32>
    %42 = vector.multi_reduction <add>, %41, %cst_28 [1] : vector<8x8xf32> to vector<8xf32>
    %43 = vector.shape_cast %42 : vector<8xf32> to vector<8x1xf32>
    %44 = tpu.reciprocal %43 {approx = true} : vector<8x1xf32> -> vector<8x1xf32>
    %45 = arith.mulf %43, %44 : vector<8x1xf32>
    %cst_29 = arith.constant 2.000000e+00 : f32
    %46 = vector.broadcast %cst_29 : f32 to vector<8x1xf32>
    %47 = arith.subf %46, %45 : vector<8x1xf32>
    %48 = arith.mulf %44, %47 : vector<8x1xf32>
    %49 = vector.broadcast %48 : vector<8x1xf32> to vector<8x8xf32>
    %50 = arith.mulf %41, %49 : vector<8x8xf32>
    %c0_30 = arith.constant 0 : index
    %c1 = arith.constant 1 : index
    %c0_31 = arith.constant 0 : index
    %c0_32 = arith.constant 0 : index
    %51 = vector.load %arg6[%c0_30, %c1, %c0_31, %c0_32] : memref<1x4x8x8xf32, #tpu.memory_space<vmem>>, vector<1x1x8x8xf32>
    %52 = vector.shape_cast %51 : vector<1x1x8x8xf32> to vector<8x8xf32>
    %53 = vector.shape_cast %50 : vector<8x8xf32> to vector<1x1x8x8xf32>
    tpu.vector_store %arg6[%c0_30, %c1, %c0_31, %c0_32], %53 {strides = array<i32>} : memref<1x4x8x8xf32, #tpu.memory_space<vmem>>, vector<1x1x8x8xf32>,
    %c0_33 = arith.constant 0 : index
    %c0_34 = arith.constant 0 : index
    %c32_35 = arith.constant 32 : index
    %54 = vector.load %arg4[%c0_33, %c0_34, %c32_35] : memref<1x8x128xf32, #tpu.memory_space<vmem>>, vector<1x8x32xf32>
    %55 = vector.shape_cast %54 : vector<1x8x32xf32> to vector<8x32xf32>
    %cst_36 = arith.constant dense<0.000000e+00> : vector<8x32xf32>
    %56 = tpu.matmul %50, %55, %cst_36 {dimension_numbers = #tpu.dot_dimension_numbers<[1], [0], [0], [1], [0, 0, 1, 1], [], []>} : vector<8x8xf32>, vector<8x32xf32>, vector<8x32xf32> -> vector<8x32xf32>
    %c0_37 = arith.constant 0 : index
    %c0_38 = arith.constant 0 : index
    %c32_39 = arith.constant 32 : index
    %57 = vector.load %arg5[%c0_37, %c0_38, %c32_39] : memref<1x8x128xf32, #tpu.memory_space<vmem>>, vector<1x8x32xf32>
    %58 = vector.shape_cast %57 : vector<1x8x32xf32> to vector<8x32xf32>
    %59 = vector.shape_cast %56 : vector<8x32xf32> to vector<1x8x32xf32>
    tpu.vector_store %arg5[%c0_37, %c0_38, %c32_39], %59 {strides = array<i32>} : memref<1x8x128xf32, #tpu.memory_space<vmem>>, vector<1x8x32xf32>,
    %c0_40 = arith.constant 0 : index
    %c0_41 = arith.constant 0 : index
    %c64 = arith.constant 64 : index
    %60 = vector.load %arg2[%c0_40, %c0_41, %c64] : memref<1x8x128xf32, #tpu.memory_space<vmem>>, vector<1x8x32xf32>
    %61 = vector.shape_cast %60 : vector<1x8x32xf32> to vector<8x32xf32>
    %cst_42 = arith.constant 0.176776692 : f32
    %62 = vector.broadcast %cst_42 : f32 to vector<8x32xf32>
    %63 = arith.mulf %61, %62 : vector<8x32xf32>
    %c0_43 = arith.constant 0 : index
    %c0_44 = arith.constant 0 : index
    %c64_45 = arith.constant 64 : index
    %64 = vector.load %arg3[%c0_43, %c0_44, %c64_45] : memref<1x8x128xf32, #tpu.memory_space<vmem>>, vector<1x8x32xf32>
    %65 = vector.shape_cast %64 : vector<1x8x32xf32> to vector<8x32xf32>
    %cst_46 = arith.constant dense<0.000000e+00> : vector<8x8xf32>
    %66 = tpu.matmul %63, %65, %cst_46 {dimension_numbers = #tpu.dot_dimension_numbers<[1], [1], [0], [0], [0, 0, 1, 0], [], []>} : vector<8x32xf32>, vector<8x32xf32>, vector<8x8xf32> -> vector<8x8xf32>
    %cst_47 = arith.constant dense<0xFF800000> : vector<8xf32>
    %67 = vector.multi_reduction <maximumf>, %66, %cst_47 [1] : vector<8x8xf32> to vector<8xf32>
    %68 = vector.shape_cast %67 : vector<8xf32> to vector<8x1xf32>
    %69 = vector.broadcast %68 : vector<8x1xf32> to vector<8x8xf32>
    %70 = arith.subf %66, %69 : vector<8x8xf32>
    %71 = math.exp %70 : vector<8x8xf32>
    %cst_48 = arith.constant dense<0.000000e+00> : vector<8xf32>
    %72 = vector.multi_reduction <add>, %71, %cst_48 [1] : vector<8x8xf32> to vector<8xf32>
    %73 = vector.shape_cast %72 : vector<8xf32> to vector<8x1xf32>
    %74 = tpu.reciprocal %73 {approx = true} : vector<8x1xf32> -> vector<8x1xf32>
    %75 = arith.mulf %73, %74 : vector<8x1xf32>
    %cst_49 = arith.constant 2.000000e+00 : f32
    %76 = vector.broadcast %cst_49 : f32 to vector<8x1xf32>
    %77 = arith.subf %76, %75 : vector<8x1xf32>
    %78 = arith.mulf %74, %77 : vector<8x1xf32>
    %79 = vector.broadcast %78 : vector<8x1xf32> to vector<8x8xf32>
    %80 = arith.mulf %71, %79 : vector<8x8xf32>
    %c0_50 = arith.constant 0 : index
    %c2 = arith.constant 2 : index
    %c0_51 = arith.constant 0 : index
    %c0_52 = arith.constant 0 : index
    %81 = vector.load %arg6[%c0_50, %c2, %c0_51, %c0_52] : memref<1x4x8x8xf32, #tpu.memory_space<vmem>>, vector<1x1x8x8xf32>
    %82 = vector.shape_cast %81 : vector<1x1x8x8xf32> to vector<8x8xf32>
    %83 = vector.shape_cast %80 : vector<8x8xf32> to vector<1x1x8x8xf32>
    tpu.vector_store %arg6[%c0_50, %c2, %c0_51, %c0_52], %83 {strides = array<i32>} : memref<1x4x8x8xf32, #tpu.memory_space<vmem>>, vector<1x1x8x8xf32>,
    %c0_53 = arith.constant 0 : index
    %c0_54 = arith.constant 0 : index
    %c64_55 = arith.constant 64 : index
    %84 = vector.load %arg4[%c0_53, %c0_54, %c64_55] : memref<1x8x128xf32, #tpu.memory_space<vmem>>, vector<1x8x32xf32>
    %85 = vector.shape_cast %84 : vector<1x8x32xf32> to vector<8x32xf32>
    %cst_56 = arith.constant dense<0.000000e+00> : vector<8x32xf32>
    %86 = tpu.matmul %80, %85, %cst_56 {dimension_numbers = #tpu.dot_dimension_numbers<[1], [0], [0], [1], [0, 0, 1, 1], [], []>} : vector<8x8xf32>, vector<8x32xf32>, vector<8x32xf32> -> vector<8x32xf32>
    %c0_57 = arith.constant 0 : index
    %c0_58 = arith.constant 0 : index
    %c64_59 = arith.constant 64 : index
    %87 = vector.load %arg5[%c0_57, %c0_58, %c64_59] : memref<1x8x128xf32, #tpu.memory_space<vmem>>, vector<1x8x32xf32>
    %88 = vector.shape_cast %87 : vector<1x8x32xf32> to vector<8x32xf32>
    %89 = vector.shape_cast %86 : vector<8x32xf32> to vector<1x8x32xf32>
    tpu.vector_store %arg5[%c0_57, %c0_58, %c64_59], %89 {strides = array<i32>} : memref<1x8x128xf32, #tpu.memory_space<vmem>>, vector<1x8x32xf32>,
    %c0_60 = arith.constant 0 : index
    %c0_61 = arith.constant 0 : index
    %c96 = arith.constant 96 : index
    %90 = vector.load %arg2[%c0_60, %c0_61, %c96] : memref<1x8x128xf32, #tpu.memory_space<vmem>>, vector<1x8x32xf32>
    %91 = vector.shape_cast %90 : vector<1x8x32xf32> to vector<8x32xf32>
    %cst_62 = arith.constant 0.176776692 : f32
    %92 = vector.broadcast %cst_62 : f32 to vector<8x32xf32>
    %93 = arith.mulf %91, %92 : vector<8x32xf32>
    %c0_63 = arith.constant 0 : index
    %c0_64 = arith.constant 0 : index
    %c96_65 = arith.constant 96 : index
    %94 = vector.load %arg3[%c0_63, %c0_64, %c96_65] : memref<1x8x128xf32, #tpu.memory_space<vmem>>, vector<1x8x32xf32>
    %95 = vector.shape_cast %94 : vector<1x8x32xf32> to vector<8x32xf32>
    %cst_66 = arith.constant dense<0.000000e+00> : vector<8x8xf32>
    %96 = tpu.matmul %93, %95, %cst_66 {dimension_numbers = #tpu.dot_dimension_numbers<[1], [1], [0], [0], [0, 0, 1, 0], [], []>} : vector<8x32xf32>, vector<8x32xf32>, vector<8x8xf32> -> vector<8x8xf32>
    %cst_67 = arith.constant dense<0xFF800000> : vector<8xf32>
    %97 = vector.multi_reduction <maximumf>, %96, %cst_67 [1] : vector<8x8xf32> to vector<8xf32>
    %98 = vector.shape_cast %97 : vector<8xf32> to vector<8x1xf32>
    %99 = vector.broadcast %98 : vector<8x1xf32> to vector<8x8xf32>
    %100 = arith.subf %96, %99 : vector<8x8xf32>
    %101 = math.exp %100 : vector<8x8xf32>
    %cst_68 = arith.constant dense<0.000000e+00> : vector<8xf32>
    %102 = vector.multi_reduction <add>, %101, %cst_68 [1] : vector<8x8xf32> to vector<8xf32>
    %103 = vector.shape_cast %102 : vector<8xf32> to vector<8x1xf32>
    %104 = tpu.reciprocal %103 {approx = true} : vector<8x1xf32> -> vector<8x1xf32>
    %105 = arith.mulf %103, %104 : vector<8x1xf32>
    %cst_69 = arith.constant 2.000000e+00 : f32
    %106 = vector.broadcast %cst_69 : f32 to vector<8x1xf32>
    %107 = arith.subf %106, %105 : vector<8x1xf32>
    %108 = arith.mulf %104, %107 : vector<8x1xf32>
    %109 = vector.broadcast %108 : vector<8x1xf32> to vector<8x8xf32>
    %110 = arith.mulf %101, %109 : vector<8x8xf32>
    %c0_70 = arith.constant 0 : index
    %c3 = arith.constant 3 : index
    %c0_71 = arith.constant 0 : index
    %c0_72 = arith.constant 0 : index
    %111 = vector.load %arg6[%c0_70, %c3, %c0_71, %c0_72] : memref<1x4x8x8xf32, #tpu.memory_space<vmem>>, vector<1x1x8x8xf32>
    %112 = vector.shape_cast %111 : vector<1x1x8x8xf32> to vector<8x8xf32>
    %113 = vector.shape_cast %110 : vector<8x8xf32> to vector<1x1x8x8xf32>
    tpu.vector_store %arg6[%c0_70, %c3, %c0_71, %c0_72], %113 {strides = array<i32>} : memref<1x4x8x8xf32, #tpu.memory_space<vmem>>, vector<1x1x8x8xf32>,
    %c0_73 = arith.constant 0 : index
    %c0_74 = arith.constant 0 : index
    %c96_75 = arith.constant 96 : index
    %114 = vector.load %arg4[%c0_73, %c0_74, %c96_75] : memref<1x8x128xf32, #tpu.memory_space<vmem>>, vector<1x8x32xf32>
    %115 = vector.shape_cast %114 : vector<1x8x32xf32> to vector<8x32xf32>
    %cst_76 = arith.constant dense<0.000000e+00> : vector<8x32xf32>
    %116 = tpu.matmul %110, %115, %cst_76 {dimension_numbers = #tpu.dot_dimension_numbers<[1], [0], [0], [1], [0, 0, 1, 1], [], []>} : vector<8x8xf32>, vector<8x32xf32>, vector<8x32xf32> -> vector<8x32xf32>
    %c0_77 = arith.constant 0 : index
    %c0_78 = arith.constant 0 : index
    %c96_79 = arith.constant 96 : index
    %117 = vector.load %arg5[%c0_77, %c0_78, %c96_79] : memref<1x8x128xf32, #tpu.memory_space<vmem>>, vector<1x8x32xf32>
    %118 = vector.shape_cast %117 : vector<1x8x32xf32> to vector<8x32xf32>
    %119 = vector.shape_cast %116 : vector<8x32xf32> to vector<1x8x32xf32>
    tpu.vector_store %arg5[%c0_77, %c0_78, %c96_79], %119 {strides = array<i32>} : memref<1x8x128xf32, #tpu.memory_space<vmem>>, vector<1x8x32xf32>,
    return
  }
  func.func @transform_0(%arg0: i32, %arg1: i32) -> (i32, i32, i32) {
    %c0_i32 = arith.constant 0 : i32
    %c0_i32_0 = arith.constant 0 : i32
    return %arg0, %arg1, %c0_i32 : i32, i32, i32
  }
  func.func @transform_1(%arg0: i32, %arg1: i32) -> (i32, i32, i32) {
    %c0_i32 = arith.constant 0 : i32
    %c0_i32_0 = arith.constant 0 : i32
    %c0_i32_1 = arith.constant 0 : i32
    return %arg0, %c0_i32, %c0_i32_0 : i32, i32, i32
  }
  func.func @transform_2(%arg0: i32, %arg1: i32) -> (i32, i32, i32) {
    %c0_i32 = arith.constant 0 : i32
    %c0_i32_0 = arith.constant 0 : i32
    %c0_i32_1 = arith.constant 0 : i32
    return %arg0, %c0_i32, %c0_i32_0 : i32, i32, i32
  }
  func.func @transform_3(%arg0: i32, %arg1: i32) -> (i32, i32, i32) {
    %c0_i32 = arith.constant 0 : i32
    %c0_i32_0 = arith.constant 0 : i32
    return %arg0, %arg1, %c0_i32 : i32, i32, i32
  }
  func.func @transform_4(%arg0: i32, %arg1: i32) -> (i32, i32, i32, i32) {
    %c0_i32 = arith.constant 0 : i32
    %c0_i32_0 = arith.constant 0 : i32
    %c0_i32_1 = arith.constant 0 : i32
    return %arg0, %c0_i32, %arg1, %c0_i32_0 : i32, i32, i32, i32
  }
}

</mosaic_0001>

<llo_original>
// kernel: tpu_custom_call.1
$region0: #{tpu_custom_call.1}
  #allocation0 [shape = 'u32[]', space=smem, size = 0x4, offset = 0x4, fixed_abs, tag = 'smem constant byte address 0x4 - core index']
  #allocation1 [shape = 'u32[72,128]{1,0:T(1,128)}', space=vmem, size = 0x9000, scoped, tag = 'internal scratch']
  %s0 = inlined_call_operand.hbm [shape: f32[2,8,128], index: 0, kind: input, shape index: {}]
  %s1 = inlined_call_operand.hbm [shape: f32[2,8,128], index: 1, kind: input, shape index: {}]
  %s2 = inlined_call_operand.hbm [shape: f32[2,8,128], index: 2, kind: input, shape index: {}]
  %s3 = inlined_call_operand.hbm [shape: f32[2,8,128], index: 3, kind: output, shape index: {0}]
  %s4 = inlined_call_operand.hbm [shape: f32[2,4,8,8], index: 4, kind: output, shape index: {1}]
  %5 = xla_tuple %s3, %s4
  %s6 = sld [smem:[#allocation0]]
  $region65: #{tpu_custom_call.1} parent=0
    _
  %s8 = ssub.s32 1, %s6
  %s9 = scalar_select 0, %s8, %s6
  $region1: #{tpu_custom_call.1} parent=0
    #allocation2 [shape = 'u8[8192]{0}', space=vmem, size = 0x2000, scoped, tag = 'input window, operand 0']
    #allocation3 [shape = 's32[2]{0}', space=sflag, size = 0x8, scoped, tag = 'scoped memory for tpu_custom_call.1']
    #allocation4 [shape = 's32[2]{0}', space=sflag, size = 0x8, scoped, tag = 'scoped memory for tpu_custom_call.1']
    #allocation5 [shape = 'u8[8192]{0}', space=vmem, size = 0x2000, scoped, tag = 'input window, operand 1']
    #allocation6 [shape = 's32[2]{0}', space=sflag, size = 0x8, scoped, tag = 'scoped memory for tpu_custom_call.1']
    #allocation7 [shape = 'u8[8192]{0}', space=vmem, size = 0x2000, scoped, tag = 'input window, operand 2']
    #allocation8 [shape = 'u8[8192]{0}', space=vmem, size = 0x2000, scoped, tag = 'output window, operand 0']
    #allocation9 [shape = 'u8[32768]{0}', space=vmem, size = 0x8000, scoped, tag = 'output window, operand 1']
    #allocation10 [shape = 's32[2]{0}', space=sflag, size = 0x8, scoped, tag = 'scoped memory for tpu_custom_call.1']
    %10 = vsyncpa [#allocation3], 0
    %s11 = scalar_lea.sflag [#allocation3], 1
    %12 = vsyncpa %s11, 0
    %13 = vsyncpa [#allocation6], 0
    %s14 = scalar_lea.sflag [#allocation6], 1
    %15 = vsyncpa %s14, 0
    %16 = vsyncpa [#allocation4], 0
    %s17 = scalar_lea.sflag [#allocation4], 1
    %18 = vsyncpa %s17, 0
    %19 = vsyncpa [#allocation10], 0
    %s20 = scalar_lea.sflag [#allocation10], 1
    %21 = vsyncpa %s20, 0
    loop: start=0, step=1, limit=4
    $region2: #{tpu_custom_call.1} parent=1 // loop_pre_header
      _
    $region3: #{tpu_custom_call.1} parent=1 // loop_header
      %s23 = sphi 0, %s27
      %p24 = scmp.ge.s32.totalorder %s23, 4
      %s30 = sphi 0, %s42
      %s31 = sphi 0, %s38
      %s32 = sphi 0, %s30
      %s33 = sphi 0, %s31
      %s34 = sphi 0, %s32
      %s35 = sphi 0, %s33
      %s47 = sphi 0, %s49
      %s50 = sphi 0, %s47
      %s51 = sphi 0, %s50
      %s67 = sphi 0, %s51
      %s73 = sphi 0, %s75
      %s76 = sphi 0, %s73
      %s77 = sphi 0, %s76
      %s93 = sphi 0, %s77
      %s99 = sphi 0, %s101
      %s102 = sphi 0, %s99
      %s103 = sphi 0, %s102
      %s119 = sphi 0, %s103
      %s127 = sphi 0, %s129
      %s130 = sphi 0, %s127
      %s131 = sphi 0, %s130
      %s147 = sphi 0, %s131
      %s155 = sphi 0, %s157
      %s158 = sphi 0, %s155
      %s159 = sphi 0, %s158
      %s175 = sphi 0, %s159
    $region4: #{tpu_custom_call.1} parent=1 // loop_header_branch
      %26 = sbr.rel (%p24) target = $region8
    $region5: #{tpu_custom_call.1} parent=1 // loop_body
      %s28 = ssub.s32 %s23, 1
      %s29 = ssub.s32 %s23, 2
      %s36 = sadd.s32 1, %s31
      %p37 = scmp.ge.s32.totalorder %s36, 1
      %s38 = scalar_select %p37, 0, %s36
      %s39 = sadd.s32 1, %s30
      %s40 = scalar_select %p37, %s39, %s30
      %p41 = scmp.ge.s32.totalorder %s40, 2
      %s42 = scalar_select %p41, 0, %s40
      %s43 = ssub.s32 %s30, %s42
      %s44 = ssub.s32 %s31, %s38
      %s45 = sor.u32 %s43, %s44
      %p46 = scmp.eq.s32.totalorder %s45, 0
      %s48 = sadd.s32 %s47, 1
      %s49 = scalar_select %p46, %s47, %s48
      %p52 = pneg %p46
      %p53 = scmp.eq.s32.totalorder %s23, 1
      %p54 = por %p52, %p53
      %p55 = scmp.ne.s32.totalorder %s47, %s50
      %p56 = scmp.eq.s32.totalorder %s23, 0
      %p57 = por %p55, %p56
      %p58 = scmp.ne.s32.totalorder %s47, %s50
      %p59 = scmp.eq.s32.totalorder %s28, 1
      %p60 = por %p58, %p59
      %p61 = scmp.ne.s32.totalorder %s50, %s51
      %p62 = scmp.eq.s32.totalorder %s28, 0
      %p63 = por %p61, %p62
      %p64 = scmp.ne.s32.totalorder %s50, %s51
      %p65 = scmp.eq.s32.totalorder %s29, 1
      %p66 = por %p64, %p65
      %p68 = scmp.ne.s32.totalorder %s51, %s67
      %p69 = scmp.eq.s32.totalorder %s29, 0
      %p70 = por %p68, %p69
      %s71 = ssub.s32 %s30, %s42
      %p72 = scmp.eq.s32.totalorder %s71, 0
      %s74 = sadd.s32 %s73, 1
      %s75 = scalar_select %p72, %s73, %s74
      %p78 = pneg %p72
      %p79 = scmp.eq.s32.totalorder %s23, 1
      %p80 = por %p78, %p79
      %p81 = scmp.ne.s32.totalorder %s73, %s76
      %p82 = scmp.eq.s32.totalorder %s23, 0
      %p83 = por %p81, %p82
      %p84 = scmp.ne.s32.totalorder %s73, %s76
      %p85 = scmp.eq.s32.totalorder %s28, 1
      %p86 = por %p84, %p85
      %p87 = scmp.ne.s32.totalorder %s76, %s77
      %p88 = scmp.eq.s32.totalorder %s28, 0
      %p89 = por %p87, %p88
      %p90 = scmp.ne.s32.totalorder %s76, %s77
      %p91 = scmp.eq.s32.totalorder %s29, 1
      %p92 = por %p90, %p91
      %p94 = scmp.ne.s32.totalorder %s77, %s93
      %p95 = scmp.eq.s32.totalorder %s29, 0
      %p96 = por %p94, %p95
      %s97 = ssub.s32 %s30, %s42
      %p98 = scmp.eq.s32.totalorder %s97, 0
      %s100 = sadd.s32 %s99, 1
      %s101 = scalar_select %p98, %s99, %s100
      %p104 = pneg %p98
      %p105 = scmp.eq.s32.totalorder %s23, 1
      %p106 = por %p104, %p105
      %p107 = scmp.ne.s32.totalorder %s99, %s102
      %p108 = scmp.eq.s32.totalorder %s23, 0
      %p109 = por %p107, %p108
      %p110 = scmp.ne.s32.totalorder %s99, %s102
      %p111 = scmp.eq.s32.totalorder %s28, 1
      %p112 = por %p110, %p111
      %p113 = scmp.ne.s32.totalorder %s102, %s103
      %p114 = scmp.eq.s32.totalorder %s28, 0
      %p115 = por %p113, %p114
      %p116 = scmp.ne.s32.totalorder %s102, %s103
      %p117 = scmp.eq.s32.totalorder %s29, 1
      %p118 = por %p116, %p117
      %p120 = scmp.ne.s32.totalorder %s103, %s119
      %p121 = scmp.eq.s32.totalorder %s29, 0
      %p122 = por %p120, %p121
      %s123 = ssub.s32 %s30, %s42
      %s124 = ssub.s32 %s31, %s38
      %s125 = sor.u32 %s123, %s124
      %p126 = scmp.eq.s32.totalorder %s125, 0
      %s128 = sadd.s32 %s127, 1
      %s129 = scalar_select %p126, %s127, %s128
      %p132 = pneg %p126
      %p133 = scmp.eq.s32.totalorder %s23, 1
      %p134 = por %p132, %p133
      %p135 = scmp.ne.s32.totalorder %s127, %s130
      %p136 = scmp.eq.s32.totalorder %s23, 0
      %p137 = por %p135, %p136
      %p138 = scmp.ne.s32.totalorder %s127, %s130
      %p139 = scmp.eq.s32.totalorder %s28, 1
      %p140 = por %p138, %p139
      %p141 = scmp.ne.s32.totalorder %s130, %s131
      %p142 = scmp.eq.s32.totalorder %s28, 0
      %p143 = por %p141, %p142
      %p144 = scmp.ne.s32.totalorder %s130, %s131
      %p145 = scmp.eq.s32.totalorder %s29, 1
      %p146 = por %p144, %p145
      %p148 = scmp.ne.s32.totalorder %s131, %s147
      %p149 = scmp.eq.s32.totalorder %s29, 0
      %p150 = por %p148, %p149
      %s151 = ssub.s32 %s30, %s42
      %s152 = ssub.s32 %s31, %s38
      %s153 = sor.u32 %s151, %s152
      %p154 = scmp.eq.s32.totalorder %s153, 0
      %s156 = sadd.s32 %s155, 1
      %s157 = scalar_select %p154, %s155, %s156
      %p160 = pneg %p154
      %p161 = scmp.eq.s32.totalorder %s23, 1
      %p162 = por %p160, %p161
      %p163 = scmp.ne.s32.totalorder %s155, %s158
      %p164 = scmp.eq.s32.totalorder %s23, 0
      %p165 = por %p163, %p164
      %p166 = scmp.ne.s32.totalorder %s155, %s158
      %p167 = scmp.eq.s32.totalorder %s28, 1
      %p168 = por %p166, %p167
      %p169 = scmp.ne.s32.totalorder %s158, %s159
      %p170 = scmp.eq.s32.totalorder %s28, 0
      %p171 = por %p169, %p170
      %p172 = scmp.ne.s32.totalorder %s158, %s159
      %p173 = scmp.eq.s32.totalorder %s29, 1
      %p174 = por %p172, %p173
      %p176 = scmp.ne.s32.totalorder %s159, %s175
      %p177 = scmp.eq.s32.totalorder %s29, 0
      %p178 = por %p176, %p177
      %p179 = scmp.le.s32.totalorder 1, %s23
      %p180 = scmp.lt.s32.totalorder %s23, 3
      %p181 = pnand %p179, %p180
      %p182 = pneg %p181
      // Predicated region
      $region9: #{tpu_custom_call.1} parent=5 // pred_check
        _
      $region10: #{tpu_custom_call.1} parent=5 // pred_check_branch
        %184 = sbr.rel (%p181) target = $region12
      $region11: #{tpu_custom_call.1} parent=5 // pred_region
        %s185 = ssub.s32 %s23, 1
      $region12: #{tpu_custom_call.1} parent=5 // pred_fallthru
        _
      %p186 = scmp.lt.s32.totalorder %s23, 2
      // Predicated region
      $region13: #{tpu_custom_call.1} parent=5 // pred_check
        %p187 = pneg %p186
      $region14: #{tpu_custom_call.1} parent=5 // pred_check_branch
        %189 = sbr.rel (%p187) target = $region16
      $region15: #{tpu_custom_call.1} parent=5 // pred_region
        // Predicated region
        $region17: #{tpu_custom_call.1} parent=15 // pred_check
          %p190 = pneg %p57
        $region18: #{tpu_custom_call.1} parent=15 // pred_check_branch
          %192 = sbr.rel (%p190) target = $region20
        $region19: #{tpu_custom_call.1} parent=15 // pred_region
          %s193 = sand.u32 %s47, 1
          %s194 = scalar_lea.sflag [#allocation3], %s193
          %s195 = sand.u32 %s47, 1
          %s196 = smul.addr %s195, 8
          %s197 = scalar_lea.vmem [#allocation2], %s196
          %199 = vsyncadd %s194, 0
          %s200 = sadd.s32 %s31, %s30
          %s201 = smul.addr %s200, 8
          %s202 = scalar_lea.hbm %s0, %s201
          %s204 = sshll.u32 %s202, 4
          %s205 = int_to_ptr.hbm [resolvable:$true] %s204
          %s206 = sshll.u32 %s197, 4
          %s207 = int_to_ptr.vmem [resolvable:$true] %s206
          %209 = dma.hbm_to_vmem [thread:$0]  %s205, 128, %s207, %s194
        $region20: #{tpu_custom_call.1} parent=15 // pred_fallthru
          _
        // Predicated region
        $region21: #{tpu_custom_call.1} parent=15 // pred_check
          %p210 = pneg %p83
        $region22: #{tpu_custom_call.1} parent=15 // pred_check_branch
          %212 = sbr.rel (%p210) target = $region24
        $region23: #{tpu_custom_call.1} parent=15 // pred_region
          %s213 = sand.u32 %s23, 1
          %s214 = scalar_lea.sflag [#allocation6], %s213
          %s215 = sand.u32 %s73, 1
          %s216 = smul.addr %s215, 8
          %s217 = scalar_lea.vmem [#allocation5], %s216
          %219 = vsyncadd %s214, 0
          %s220 = smul.addr %s30, 8
          %s221 = scalar_lea.hbm %s1, %s220
          %s223 = sshll.u32 %s221, 4
          %s224 = int_to_ptr.hbm [resolvable:$true] %s223
          %s225 = sshll.u32 %s217, 4
          %s226 = int_to_ptr.vmem [resolvable:$true] %s225
          %228 = dma.hbm_to_vmem [thread:$0]  %s224, 128, %s226, %s214
        $region24: #{tpu_custom_call.1} parent=15 // pred_fallthru
          _
        // Predicated region
        $region25: #{tpu_custom_call.1} parent=15 // pred_check
          %p229 = pneg %p109
        $region26: #{tpu_custom_call.1} parent=15 // pred_check_branch
          %231 = sbr.rel (%p229) target = $region28
        $region27: #{tpu_custom_call.1} parent=15 // pred_region
          %s232 = sand.u32 %s23, 1
          %s233 = scalar_lea.sflag [#allocation6], %s232
          %s234 = sand.u32 %s99, 1
          %s235 = smul.addr %s234, 8
          %s236 = scalar_lea.vmem [#allocation7], %s235
          %238 = vsyncadd %s233, 0
          %s239 = smul.addr %s30, 8
          %s240 = scalar_lea.hbm %s2, %s239
          %s242 = sshll.u32 %s240, 4
          %s243 = int_to_ptr.hbm [resolvable:$true] %s242
          %s244 = sshll.u32 %s236, 4
          %s245 = int_to_ptr.vmem [resolvable:$true] %s244
          %247 = dma.hbm_to_vmem [thread:$0]  %s243, 128, %s245, %s233
        $region28: #{tpu_custom_call.1} parent=15 // pred_fallthru
          _
      $region16: #{tpu_custom_call.1} parent=5 // pred_fallthru
        _
      %p248 = scmp.le.s32.totalorder 1, %s23
      %p249 = scmp.lt.s32.totalorder %s23, 3
      %p250 = pnand %p248, %p249
      %p251 = pneg %p250
      // Predicated region
      $region29: #{tpu_custom_call.1} parent=5 // pred_check
        _
      $region30: #{tpu_custom_call.1} parent=5 // pred_check_branch
        %253 = sbr.rel (%p250) target = $region32
      $region31: #{tpu_custom_call.1} parent=5 // pred_region
        %s254 = ssub.s32 %s23, 1
        %s255 = sand.u32 %s50, 1
        %s256 = scalar_lea.sflag [#allocation3], %s255
        %s257 = sand.u32 %s50, 1
        %s258 = smul.addr %s257, 8
        %s259 = scalar_lea.vmem [#allocation2], %s258
        // Predicated region
        $region33: #{tpu_custom_call.1} parent=31 // pred_check
          %p260 = pneg %p63
        $region34: #{tpu_custom_call.1} parent=31 // pred_check_branch
          %262 = sbr.rel (%p260) target = $region36
        $region35: #{tpu_custom_call.1} parent=31 // pred_region
          %264 = dma.done %s256, 128
        $region36: #{tpu_custom_call.1} parent=31 // pred_fallthru
          _
        %s265 = sand.u32 %s28, 1
        %s266 = scalar_lea.sflag [#allocation6], %s265
        %s267 = sand.u32 %s76, 1
        %s268 = smul.addr %s267, 8
        %s269 = scalar_lea.vmem [#allocation5], %s268
        // Predicated region
        $region37: #{tpu_custom_call.1} parent=31 // pred_check
          %p270 = pneg %p89
        $region38: #{tpu_custom_call.1} parent=31 // pred_check_branch
          %272 = sbr.rel (%p270) target = $region40
        $region39: #{tpu_custom_call.1} parent=31 // pred_region
          %274 = dma.done %s266, 128
        $region40: #{tpu_custom_call.1} parent=31 // pred_fallthru
          _
        %s275 = sand.u32 %s28, 1
        %s276 = scalar_lea.sflag [#allocation6], %s275
        %s277 = sand.u32 %s102, 1
        %s278 = smul.addr %s277, 8
        %s279 = scalar_lea.vmem [#allocation7], %s278
        // Predicated region
        $region41: #{tpu_custom_call.1} parent=31 // pred_check
          %p280 = pneg %p115
        $region42: #{tpu_custom_call.1} parent=31 // pred_check_branch
          %282 = sbr.rel (%p280) target = $region44
        $region43: #{tpu_custom_call.1} parent=31 // pred_region
          %284 = dma.done %s276, 128
        $region44: #{tpu_custom_call.1} parent=31 // pred_fallthru
          _
        %s285 = sand.u32 %s50, 1
        %s286 = scalar_lea.sflag [#allocation3], %s285
        %s287 = sand.u32 %s50, 1
        %s288 = smul.addr %s287, 8
        %s289 = scalar_lea.vmem [#allocation2], %s288
        %p290 = pneg %p63
        %p291 = pneg %p60
        %s292 = sand.u32 %s28, 1
        %s293 = scalar_lea.sflag [#allocation6], %s292
        %s294 = sand.u32 %s76, 1
        %s295 = smul.addr %s294, 8
        %s296 = scalar_lea.vmem [#allocation5], %s295
        %p297 = pneg %p89
        %p298 = pneg %p86
        %s299 = sand.u32 %s28, 1
        %s300 = scalar_lea.sflag [#allocation6], %s299
        %s301 = sand.u32 %s102, 1
        %s302 = smul.addr %s301, 8
        %s303 = scalar_lea.vmem [#allocation7], %s302
        %p304 = pneg %p115
        %p305 = pneg %p112
        %p306 = pneg %p143
        %p307 = pneg %p140
        %s308 = sand.u32 %s130, 1
        %s309 = scalar_lea.sflag [#allocation4], %s308
        %s310 = sand.u32 %s130, 1
        %s311 = smul.addr %s310, 8
        %s312 = scalar_lea.vmem [#allocation8], %s311
        %p313 = pneg %p171
        %p314 = pneg %p168
        %s315 = sand.u32 %s158, 1
        %s316 = scalar_lea.sflag [#allocation10], %s315
        %s317 = sand.u32 %s158, 1
        %s318 = smul.addr %s317, 32
        %s319 = scalar_lea.vmem [#allocation9], %s318
        %v320 = vld [vmem:[%s259] sm:$0xff]
        %v321 = vmul.f32 %v320, 0.17677669
        %v322 = vld [vmem:[%s269] sm:$0xff]
        %vm323 = vcmask 261120
        %v325 = vsel %vm323, %v321, 0
        %v328 = vsel %vm323, %v322, 0
        %330 = vmatpush.xpose.msra.mxu0 0.0
        %331 = vmatpush.xpose.msra.mxu0 0.0
        %332 = vmatpush.xpose.msra.mxu0 0.0
        %333 = vmatpush.xpose.msra.mxu0 0.0
        %334 = vmatpush.xpose.msra.mxu0 0.0
        %335 = vmatpush.xpose.msra.mxu0 0.0
        %336 = vmatpush.xpose.msra.mxu0 0.0
        %337 = vmatpush.xpose.msra.mxu0 0.0
        %338 = vmatpush.xpose.msra.mxu0 0.0
        %339 = vmatpush.xpose.msra.mxu0 0.0
        %340 = vmatpush.xpose.msra.mxu0 0.0
        %341 = vmatpush.xpose.msra.mxu0 0.0
        %342 = vmatpush.xpose.msra.mxu0 0.0
        %343 = vmatpush.xpose.msra.mxu0 0.0
        %344 = vmatpush.xpose.msra.mxu0 0.0
        %345 = vmatpush.xpose.msra.mxu0 %v328
        %346 = vmatmul.f32.gmra.mxu0 %v325
        %v347 = vpop.f32.mrf.mxu0
        %v348 = vadd.f32 0.0, %v347
        %349 = vdwg.mxu0
        %vm350 = vcmask 64512
        %v351 = vsel %vm350, %v348, -inf
        %352 = vmax.xlane.f32.xlu0 %v351
        %v353 = vpop.xlane.xlu0 %352
        %v354 = vsub.f32 %v348, %v353
        %v355 = vmul.f32 %v354, 1.442695
        %v356 = vpow.pop %v355
        %v357 = vsel %vm350, %v356, 0.0
        %358 = vadd.xlane.f32.xlu0 %v357
        %v359 = vpop.xlane.xlu0 %358
        %v360 = vrcp.pop %v359
        %v361 = vmul.f32 %v359, %v360
        %v362 = vsub.f32 2.0, %v361
        %v363 = vmul.f32 %v360, %v362
        %v364 = vmul.f32 %v356, %v363
        %365 = vst.msk [vmem:[%s319] sm:$0xff] %vm350, %v364
        %v366 = vld [vmem:[%s279] sm:$0xff]
        %v368 = vsel %vm350, %v364, 0
        %370 = vmatpush.msra.mxu0 0.0
        %371 = vmatpush.msra.mxu0 0.0
        %372 = vmatpush.msra.mxu0 0.0
        %373 = vmatpush.msra.mxu0 0.0
        %374 = vmatpush.msra.mxu0 0.0
        %375 = vmatpush.msra.mxu0 0.0
        %376 = vmatpush.msra.mxu0 0.0
        %377 = vmatpush.msra.mxu0 0.0
        %378 = vmatpush.msra.mxu0 0.0
        %379 = vmatpush.msra.mxu0 0.0
        %380 = vmatpush.msra.mxu0 0.0
        %381 = vmatpush.msra.mxu0 0.0
        %382 = vmatpush.msra.mxu0 0.0
        %383 = vmatpush.msra.mxu0 0.0
        %384 = vmatpush.msra.mxu0 0.0
        %385 = vmatpush.msra.mxu0 %v366
        %386 = vmatmul.f32.gmra.mxu0 %v368
        %v387 = vpop.f32.mrf.mxu0
        %v388 = vadd.f32 0.0, %v387
        %389 = vdwg.mxu0
        %390 = vst.msk [vmem:[%s312] sm:$0xff] %vm323, %v388
        %v391 = vld [vmem:[%s259] sm:$0xff]
        %v392 = vmul.f32 %v391, 0.17677669
        %v393 = vld [vmem:[%s269] sm:$0xff]
        %395 = vrot.lane.b32.xlu0 %v392, 96
        %v396 = vpop.permute.xlu0 %395
        %398 = vrot.lane.b32.xlu0 %v393, 96
        %v399 = vpop.permute.xlu0 %398
        %v400 = vsel %vm323, %v396, 0
        %v402 = vsel %vm323, %v399, 0
        %404 = vmatpush.xpose.msra.mxu0 0.0
        %405 = vmatpush.xpose.msra.mxu0 0.0
        %406 = vmatpush.xpose.msra.mxu0 0.0
        %407 = vmatpush.xpose.msra.mxu0 0.0
        %408 = vmatpush.xpose.msra.mxu0 0.0
        %409 = vmatpush.xpose.msra.mxu0 0.0
        %410 = vmatpush.xpose.msra.mxu0 0.0
        %411 = vmatpush.xpose.msra.mxu0 0.0
        %412 = vmatpush.xpose.msra.mxu0 0.0
        %413 = vmatpush.xpose.msra.mxu0 0.0
        %414 = vmatpush.xpose.msra.mxu0 0.0
        %415 = vmatpush.xpose.msra.mxu0 0.0
        %416 = vmatpush.xpose.msra.mxu0 0.0
        %417 = vmatpush.xpose.msra.mxu0 0.0
        %418 = vmatpush.xpose.msra.mxu0 0.0
        %419 = vmatpush.xpose.msra.mxu0 %v402
        %420 = vmatmul.f32.gmra.mxu0 %v400
        %v421 = vpop.f32.mrf.mxu0
        %v422 = vadd.f32 0.0, %v421
        %423 = vdwg.mxu0
        %v424 = vsel %vm350, %v422, -inf
        %425 = vmax.xlane.f32.xlu0 %v424
        %v426 = vpop.xlane.xlu0 %425
        %v427 = vsub.f32 %v422, %v426
        %v428 = vmul.f32 %v427, 1.442695
        %v429 = vpow.pop %v428
        %v430 = vsel %vm350, %v429, 0.0
        %431 = vadd.xlane.f32.xlu0 %v430
        %v432 = vpop.xlane.xlu0 %431
        %v433 = vrcp.pop %v432
        %v434 = vmul.f32 %v432, %v433
        %v435 = vsub.f32 2.0, %v434
        %v436 = vmul.f32 %v433, %v435
        %v437 = vmul.f32 %v429, %v436
        %s438 = scalar_lea.vmem %s319, 8 [#allocation9]
        %439 = vst.msk [vmem:[%s438] sm:$0xff] %vm350, %v437
        %v440 = vld [vmem:[%s279] sm:$0xff]
        %442 = vrot.lane.b32.xlu0 %v440, 96
        %v443 = vpop.permute.xlu0 %442
        %v446 = vsel %vm350, %v437, 0
        %448 = vmatpush.msra.mxu0 0.0
        %449 = vmatpush.msra.mxu0 0.0
        %450 = vmatpush.msra.mxu0 0.0
        %451 = vmatpush.msra.mxu0 0.0
        %452 = vmatpush.msra.mxu0 0.0
        %453 = vmatpush.msra.mxu0 0.0
        %454 = vmatpush.msra.mxu0 0.0
        %455 = vmatpush.msra.mxu0 0.0
        %456 = vmatpush.msra.mxu0 0.0
        %457 = vmatpush.msra.mxu0 0.0
        %458 = vmatpush.msra.mxu0 0.0
        %459 = vmatpush.msra.mxu0 0.0
        %460 = vmatpush.msra.mxu0 0.0
        %461 = vmatpush.msra.mxu0 0.0
        %462 = vmatpush.msra.mxu0 0.0
        %463 = vmatpush.msra.mxu0 %v443
        %464 = vmatmul.f32.gmra.mxu0 %v446
        %v465 = vpop.f32.mrf.mxu0
        %v466 = vadd.f32 0.0, %v465
        %467 = vdwg.mxu0
        %469 = vrot.lane.b32.xlu0 %v466, 32
        %v470 = vpop.permute.xlu0 %469
        %vm472 = vcmask 523520
        %473 = vst.msk [vmem:[%s312] sm:$0xff] %vm472, %v470
        %v474 = vld [vmem:[%s259] sm:$0xff]
        %v475 = vmul.f32 %v474, 0.17677669
        %v476 = vld [vmem:[%s269] sm:$0xff]
        %478 = vrot.lane.b32.xlu0 %v475, 64
        %v479 = vpop.permute.xlu0 %478
        %481 = vrot.lane.b32.xlu0 %v476, 64
        %v482 = vpop.permute.xlu0 %481
        %v483 = vsel %vm323, %v479, 0
        %v485 = vsel %vm323, %v482, 0
        %487 = vmatpush.xpose.msra.mxu0 0.0
        %488 = vmatpush.xpose.msra.mxu0 0.0
        %489 = vmatpush.xpose.msra.mxu0 0.0
        %490 = vmatpush.xpose.msra.mxu0 0.0
        %491 = vmatpush.xpose.msra.mxu0 0.0
        %492 = vmatpush.xpose.msra.mxu0 0.0
        %493 = vmatpush.xpose.msra.mxu0 0.0
        %494 = vmatpush.xpose.msra.mxu0 0.0
        %495 = vmatpush.xpose.msra.mxu0 0.0
        %496 = vmatpush.xpose.msra.mxu0 0.0
        %497 = vmatpush.xpose.msra.mxu0 0.0
        %498 = vmatpush.xpose.msra.mxu0 0.0
        %499 = vmatpush.xpose.msra.mxu0 0.0
        %500 = vmatpush.xpose.msra.mxu0 0.0
        %501 = vmatpush.xpose.msra.mxu0 0.0
        %502 = vmatpush.xpose.msra.mxu0 %v485
        %503 = vmatmul.f32.gmra.mxu0 %v483
        %v504 = vpop.f32.mrf.mxu0
        %v505 = vadd.f32 0.0, %v504
        %506 = vdwg.mxu0
        %v507 = vsel %vm350, %v505, -inf
        %508 = vmax.xlane.f32.xlu0 %v507
        %v509 = vpop.xlane.xlu0 %508
        %v510 = vsub.f32 %v505, %v509
        %v511 = vmul.f32 %v510, 1.442695
        %v512 = vpow.pop %v511
        %v513 = vsel %vm350, %v512, 0.0
        %514 = vadd.xlane.f32.xlu0 %v513
        %v515 = vpop.xlane.xlu0 %514
        %v516 = vrcp.pop %v515
        %v517 = vmul.f32 %v515, %v516
        %v518 = vsub.f32 2.0, %v517
        %v519 = vmul.f32 %v516, %v518
        %v520 = vmul.f32 %v512, %v519
        %s521 = scalar_lea.vmem %s319, 16 [#allocation9]
        %522 = vst.msk [vmem:[%s521] sm:$0xff] %vm350, %v520
        %v523 = vld [vmem:[%s279] sm:$0xff]
        %525 = vrot.lane.b32.xlu0 %v523, 64
        %v526 = vpop.permute.xlu0 %525
        %v529 = vsel %vm350, %v520, 0
        %531 = vmatpush.msra.mxu0 0.0
        %532 = vmatpush.msra.mxu0 0.0
        %533 = vmatpush.msra.mxu0 0.0
        %534 = vmatpush.msra.mxu0 0.0
        %535 = vmatpush.msra.mxu0 0.0
        %536 = vmatpush.msra.mxu0 0.0
        %537 = vmatpush.msra.mxu0 0.0
        %538 = vmatpush.msra.mxu0 0.0
        %539 = vmatpush.msra.mxu0 0.0
        %540 = vmatpush.msra.mxu0 0.0
        %541 = vmatpush.msra.mxu0 0.0
        %542 = vmatpush.msra.mxu0 0.0
        %543 = vmatpush.msra.mxu0 0.0
        %544 = vmatpush.msra.mxu0 0.0
        %545 = vmatpush.msra.mxu0 0.0
        %546 = vmatpush.msra.mxu0 %v526
        %547 = vmatmul.f32.gmra.mxu0 %v529
        %v548 = vpop.f32.mrf.mxu0
        %v549 = vadd.f32 0.0, %v548
        %550 = vdwg.mxu0
        %552 = vrot.lane.b32.xlu0 %v549, 64
        %v553 = vpop.permute.xlu0 %552
        %vm555 = vcmask 785920
        %556 = vst.msk [vmem:[%s312] sm:$0xff] %vm555, %v553
        %v557 = vld [vmem:[%s259] sm:$0xff]
        %v558 = vmul.f32 %v557, 0.17677669
        %v559 = vld [vmem:[%s269] sm:$0xff]
        %561 = vrot.lane.b32.xlu0 %v558, 32
        %v562 = vpop.permute.xlu0 %561
        %564 = vrot.lane.b32.xlu0 %v559, 32
        %v565 = vpop.permute.xlu0 %564
        %v566 = vsel %vm323, %v562, 0
        %v568 = vsel %vm323, %v565, 0
        %570 = vmatpush.xpose.msra.mxu0 0.0
        %571 = vmatpush.xpose.msra.mxu0 0.0
        %572 = vmatpush.xpose.msra.mxu0 0.0
        %573 = vmatpush.xpose.msra.mxu0 0.0
        %574 = vmatpush.xpose.msra.mxu0 0.0
        %575 = vmatpush.xpose.msra.mxu0 0.0
        %576 = vmatpush.xpose.msra.mxu0 0.0
        %577 = vmatpush.xpose.msra.mxu0 0.0
        %578 = vmatpush.xpose.msra.mxu0 0.0
        %579 = vmatpush.xpose.msra.mxu0 0.0
        %580 = vmatpush.xpose.msra.mxu0 0.0
        %581 = vmatpush.xpose.msra.mxu0 0.0
        %582 = vmatpush.xpose.msra.mxu0 0.0
        %583 = vmatpush.xpose.msra.mxu0 0.0
        %584 = vmatpush.xpose.msra.mxu0 0.0
        %585 = vmatpush.xpose.msra.mxu0 %v568
        %586 = vmatmul.f32.gmra.mxu0 %v566
        %v587 = vpop.f32.mrf.mxu0
        %v588 = vadd.f32 0.0, %v587
        %589 = vdwg.mxu0
        %v590 = vsel %vm350, %v588, -inf
        %591 = vmax.xlane.f32.xlu0 %v590
        %v592 = vpop.xlane.xlu0 %591
        %v593 = vsub.f32 %v588, %v592
        %v594 = vmul.f32 %v593, 1.442695
        %v595 = vpow.pop %v594
        %v596 = vsel %vm350, %v595, 0.0
        %597 = vadd.xlane.f32.xlu0 %v596
        %v598 = vpop.xlane.xlu0 %597
        %v599 = vrcp.pop %v598
        %v600 = vmul.f32 %v598, %v599
        %v601 = vsub.f32 2.0, %v600
        %v602 = vmul.f32 %v599, %v601
        %v603 = vmul.f32 %v595, %v602
        %s604 = scalar_lea.vmem %s319, 24 [#allocation9]
        %605 = vst.msk [vmem:[%s604] sm:$0xff] %vm350, %v603
        %v606 = vld [vmem:[%s279] sm:$0xff]
        %608 = vrot.lane.b32.xlu0 %v606, 32
        %v609 = vpop.permute.xlu0 %608
        %v612 = vsel %vm350, %v603, 0
        %614 = vmatpush.msra.mxu0 0.0
        %615 = vmatpush.msra.mxu0 0.0
        %616 = vmatpush.msra.mxu0 0.0
        %617 = vmatpush.msra.mxu0 0.0
        %618 = vmatpush.msra.mxu0 0.0
        %619 = vmatpush.msra.mxu0 0.0
        %620 = vmatpush.msra.mxu0 0.0
        %621 = vmatpush.msra.mxu0 0.0
        %622 = vmatpush.msra.mxu0 0.0
        %623 = vmatpush.msra.mxu0 0.0
        %624 = vmatpush.msra.mxu0 0.0
        %625 = vmatpush.msra.mxu0 0.0
        %626 = vmatpush.msra.mxu0 0.0
        %627 = vmatpush.msra.mxu0 0.0
        %628 = vmatpush.msra.mxu0 0.0
        %629 = vmatpush.msra.mxu0 %v609
        %630 = vmatmul.f32.gmra.mxu0 %v612
        %v631 = vpop.f32.mrf.mxu0
        %v632 = vadd.f32 0.0, %v631
        %633 = vdwg.mxu0
        %635 = vrot.lane.b32.xlu0 %v632, 96
        %v636 = vpop.permute.xlu0 %635
        %vm638 = vcmask 1048320
        %639 = vst.msk [vmem:[%s312] sm:$0xff] %vm638, %v636
        %s640 = sand.u32 %s130, 1
        %s641 = scalar_lea.sflag [#allocation4], %s640
        %s642 = sand.u32 %s130, 1
        %s643 = smul.addr %s642, 8
        %s644 = scalar_lea.vmem [#allocation8], %s643
        %s645 = sand.u32 %s158, 1
        %s646 = scalar_lea.sflag [#allocation10], %s645
        %s647 = sand.u32 %s158, 1
        %s648 = smul.addr %s647, 32
        %s649 = scalar_lea.vmem [#allocation9], %s648
        // Predicated region
        $region45: #{tpu_custom_call.1} parent=31 // pred_check
          %p650 = pneg %p140
        $region46: #{tpu_custom_call.1} parent=31 // pred_check_branch
          %652 = sbr.rel (%p650) target = $region48
        $region47: #{tpu_custom_call.1} parent=31 // pred_region
          %654 = vsyncadd %s641, 0
          %s655 = sadd.s32 %s33, %s32
          %s656 = smul.addr %s655, 8
          %s657 = scalar_lea.hbm %s3, %s656
          %s659 = sshll.u32 %s644, 4
          %s660 = int_to_ptr.vmem [resolvable:$true] %s659
          %s661 = sshll.u32 %s657, 4
          %s662 = int_to_ptr.hbm [resolvable:$true] %s661
          %664 = dma.vmem_to_hbm [thread:$0]  %s660, 128, %s662, %s641
        $region48: #{tpu_custom_call.1} parent=31 // pred_fallthru
          _
        // Predicated region
        $region49: #{tpu_custom_call.1} parent=31 // pred_check
          %p665 = pneg %p168
        $region50: #{tpu_custom_call.1} parent=31 // pred_check_branch
          %667 = sbr.rel (%p665) target = $region52
        $region51: #{tpu_custom_call.1} parent=31 // pred_region
          %669 = vsyncadd %s646, 0
          %s670 = smul.addr %s32, 4
          %s671 = sadd.s32 %s33, %s670
          %s672 = smul.addr %s671, 8
          %s673 = scalar_lea.hbm %s4, %s672
          %s674 = sshll.u32 %s649, 4
          %s675 = int_to_ptr.vmem [resolvable:$true] %s674
          %s676 = sshll.u32 %s673, 4
          %s677 = int_to_ptr.hbm [resolvable:$true] %s676
          %682 = dma.vmem_to_hbm [thread:$0]  %s675, 512, %s677, %s646, 128, 128, 8
        $region52: #{tpu_custom_call.1} parent=31 // pred_fallthru
          _
      $region32: #{tpu_custom_call.1} parent=5 // pred_fallthru
        _
      %p683 = scmp.le.s32.totalorder 2, %s23
      // Predicated region
      $region53: #{tpu_custom_call.1} parent=5 // pred_check
        %p684 = pneg %p683
      $region54: #{tpu_custom_call.1} parent=5 // pred_check_branch
        %686 = sbr.rel (%p684) target = $region56
      $region55: #{tpu_custom_call.1} parent=5 // pred_region
        %s687 = ssub.s32 %s23, 2
        // Predicated region
        $region57: #{tpu_custom_call.1} parent=55 // pred_check
          %p688 = pneg %p146
        $region58: #{tpu_custom_call.1} parent=55 // pred_check_branch
          %690 = sbr.rel (%p688) target = $region60
        $region59: #{tpu_custom_call.1} parent=55 // pred_region
          %s691 = sand.u32 %s131, 1
          %s692 = scalar_lea.sflag [#allocation4], %s691
          %s693 = sand.u32 %s131, 1
          %s694 = smul.addr %s693, 8
          %s695 = scalar_lea.vmem [#allocation8], %s694
          %697 = dma.done %s692, 128
        $region60: #{tpu_custom_call.1} parent=55 // pred_fallthru
          _
        // Predicated region
        $region61: #{tpu_custom_call.1} parent=55 // pred_check
          %p698 = pneg %p174
        $region62: #{tpu_custom_call.1} parent=55 // pred_check_branch
          %700 = sbr.rel (%p698) target = $region64
        $region63: #{tpu_custom_call.1} parent=55 // pred_region
          %s701 = sand.u32 %s159, 1
          %s702 = scalar_lea.sflag [#allocation10], %s701
          %s703 = sand.u32 %s159, 1
          %s704 = smul.addr %s703, 32
          %s705 = scalar_lea.vmem [#allocation9], %s704
          %707 = dma.done %s702, 512
        $region64: #{tpu_custom_call.1} parent=55 // pred_fallthru
          _
      $region56: #{tpu_custom_call.1} parent=5 // pred_fallthru
        _
    $region6: #{tpu_custom_call.1} parent=1 // loop_footer
      %s27 = sadd.s32 1, %s23
    $region7: #{tpu_custom_call.1} parent=1 // loop_footer_branch
      %22 = sbr.rel target = $region3
    $region8: #{tpu_custom_call.1} parent=1 // loop_exit
      _
    %708 = vsyncpa [#allocation3], 1
    %s709 = scalar_lea.sflag [#allocation3], 1
    %710 = vsyncpa %s709, 1
    %711 = vsyncpa [#allocation6], 1
    %s712 = scalar_lea.sflag [#allocation6], 1
    %713 = vsyncpa %s712, 1
    %714 = vsyncpa [#allocation4], 1
    %s715 = scalar_lea.sflag [#allocation4], 1
    %716 = vsyncpa %s715, 1
    %717 = vsyncpa [#allocation10], 1
    %s718 = scalar_lea.sflag [#allocation10], 1
    %719 = vsyncpa %s718, 1

</llo_original>
